<compile_context>
chip_gen: v5e
topology: v5e:2x2
jax: 0.10.0
libtpu: 0.0.40
codegen_flags: <defaults>
</compile_context>

<pallas_src>
import functools

import jax
import jax.numpy as jnp
from jax.experimental import pallas as pl
from jax.experimental.pallas import tpu as pltpu


# ---------------------------------------------------------------------------
# Static helpers
# ---------------------------------------------------------------------------
def _cdiv(a, b):
    return -(-a // b)


def _round_up(x, m):
    return _cdiv(x, m) * m


@functools.lru_cache(maxsize=None)
def _vmem_capacity_bytes():
    """Physical VMEM of the local TPU (128 MiB v5e/v6e, 64 MiB per-TC v7x)."""
    try:
        return int(pltpu.get_tpu_info().vmem_capacity_bytes)
    except Exception:  # info unavailable -> be conservative (v7x-sized)
        return 64 * 2 ** 20


# ---------------------------------------------------------------------------
# Kernels (always f32 MXU accumulation, output cast to o_ref.dtype)
# ---------------------------------------------------------------------------
def _linear_kernel(x_ref, w_ref, b_ref, o_ref):
    acc = jnp.dot(x_ref[...], w_ref[...], preferred_element_type=jnp.float32)
    o_ref[...] = (acc + b_ref[...].astype(jnp.float32)).astype(o_ref.dtype)


def _linear_kernel_nobias(x_ref, w_ref, o_ref):
    acc = jnp.dot(x_ref[...], w_ref[...], preferred_element_type=jnp.float32)
    o_ref[...] = acc.astype(o_ref.dtype)


def _linear_kernel_k(x_ref, w_ref, b_ref, o_ref, acc_ref):
    k = pl.program_id(2)

    @pl.when(k == 0)
    def _():
        acc_ref[...] = jnp.zeros_like(acc_ref)

    acc_ref[...] += jnp.dot(x_ref[...], w_ref[...],
                            preferred_element_type=jnp.float32)

    @pl.when(k == pl.num_programs(2) - 1)
    def _():
        o_ref[...] = (acc_ref[...]
                      + b_ref[...].astype(jnp.float32)).astype(o_ref.dtype)


def _linear_kernel_k_nobias(x_ref, w_ref, o_ref, acc_ref):
    k = pl.program_id(2)

    @pl.when(k == 0)
    def _():
        acc_ref[...] = jnp.zeros_like(acc_ref)

    acc_ref[...] += jnp.dot(x_ref[...], w_ref[...],
                            preferred_element_type=jnp.float32)

    @pl.when(k == pl.num_programs(2) - 1)
    def _():
        o_ref[...] = acc_ref[...].astype(o_ref.dtype)


# ---------------------------------------------------------------------------
# Tiling (all static shape math)
# ---------------------------------------------------------------------------
def _pick_tiles(n, c_in, c_out, in_item, w_item, out_item, *,
                tile_n=None, force_tile_k=None, advanced_buffering=True):
    """Choose (tile_n, tile_cout, tile_k, est_vmem_bytes) from static shapes."""
    cap = _vmem_capacity_bytes()
    vmem_budget = (cap * 3) // 4      # ~75% of physical (96 MiB v5e/v6e, 48 v7x)
    w_budget = cap // 4               # resident weight block cap (32 / 16 MiB)

    # Weight blocking: keep the whole (C_in, C_out) weight resident when it
    # fits; otherwise prefer a K reduction axis (weight read once per C_out
    # block) over C_out tiling (weight re-streamed grid_n times over HBM).
    tile_k, tile_co = c_in, c_out
    full_w = c_in * c_out * w_item
    if force_tile_k is not None:
        assert force_tile_k % 128 == 0 and c_in % force_tile_k == 0, \
            "force_tile_k must be a multiple of 128 that divides c_in"
        tile_k = force_tile_k
    elif full_w > w_budget:
        if c_in % 128 == 0:
            nblk = c_in // 128
            for d in range(nblk - 1, 0, -1):      # largest divisor first
                if nblk % d == 0 and 128 * d * c_out * w_item <= w_budget:
                    tile_k = 128 * d
                    break
        if tile_k == c_in:
            # K tiling impossible -> tile C_out (weight re-streamed per row blk)
            cand = max(128, (w_budget // max(1, c_in * w_item)) // 128 * 128)
            tile_co = c_out if cand >= c_out else cand

    grid_co = _cdiv(c_out, tile_co)
    grid_k = _cdiv(c_in, tile_k)
    w_invariant = grid_co == 1 and grid_k == 1

    # Buffer counts the pipeline will actually use (feeds the VMEM estimate).
    # The optional 3rd stream buffer (small-channel layers only, <= ~2 MiB)
    # fits inside the 25% headroom and is not charged here.
    w_bufs = 1 if (advanced_buffering and w_invariant) else 2
    b_bufs = 1 if (advanced_buffering and grid_co == 1) else 2

    def vmem_bytes(tn):
        return (2 * tn * tile_k * in_item            # x tiles (double-buffered)
                + 2 * tn * tile_co * out_item        # out tiles
                + w_bufs * tile_k * tile_co * w_item  # weight block(s)
                + b_bufs * tile_co * 4               # bias block(s)
                + (tn * tile_co * 4 if grid_k > 1 else 0))  # f32 accumulator

    if tile_n is None:
        # Largest row tile (multiple of 128, <=1024) fitting the budget:
        # 512+ rows reach ~85% of HBM roofline vs ~30% at 128-row tiles.
        tn = min(1024, _round_up(n, 128))
        while tn > 128 and vmem_bytes(tn) > vmem_budget:
            tn -= 128
        # Keep >= 2 row blocks on larger N so both v7x TensorCores get rows
        # (one extra ~0.35us grid step -- near-free on single-TC v5e/v6e).
        if n > 256:
            tn = min(tn, _round_up(_cdiv(n, 2), 128))
        tile_n = max(tn, 128) if n >= 128 else _round_up(max(n, 8), 8)
    else:
        tile_n = _round_up(max(tile_n, 8), 8)

    return tile_n, tile_co, tile_k, vmem_bytes(tile_n)


def _spec(block_shape, index_map, *, buffers=None):
    """BlockSpec; `buffers=1` single-buffers a grid-invariant operand,
    `buffers=3` deepens pipelining on a streamed operand."""
    if buffers is not None and hasattr(pl, "Buffered"):
        try:
            return pl.BlockSpec(block_shape, index_map,
                                pipeline_mode=pl.Buffered(buffers))
        except TypeError:  # this JAX has no pipeline_mode kwarg
            pass
    return pl.BlockSpec(block_shape, index_map)


# ---------------------------------------------------------------------------
# Pallas wrapper
# ---------------------------------------------------------------------------
@functools.partial(
    jax.jit,
    static_argnames=("tile_n", "force_tile_k", "advanced_buffering"))
def _linear_features_impl(feats, weight_t, bias=None, *, tile_n=None,
                          force_tile_k=None, advanced_buffering=True):
    """feats @ weight_t (+ bias). feats: (N, C_in), weight_t: (C_in, C_out)."""
    n, c_in = feats.shape
    c_in_w, c_out = weight_t.shape
    assert c_in == c_in_w, (c_in, c_in_w)

    in_item = jnp.dtype(feats.dtype).itemsize
    w_item = jnp.dtype(weight_t.dtype).itemsize
    out_dtype = feats.dtype
    out_item = jnp.dtype(out_dtype).itemsize

    tn, tco, tk, needed = _pick_tiles(
        n, c_in, c_out, in_item, w_item, out_item,
        tile_n=tile_n, force_tile_k=force_tile_k,
        advanced_buffering=advanced_buffering)

    grid_n = _cdiv(n, tn)            # partial last row block is masked on store
    grid_co = _cdiv(c_out, tco)
    grid_k = _cdiv(c_in, tk)
    total_steps = grid_n * grid_co * grid_k
    w_invariant = grid_co == 1 and grid_k == 1

    # Deeper pipelining on the streamed operands only pays off for small tiles
    # (per-step DMA is a few us against v7x's 3.2 TB/s HBM) and >1-2 steps.
    deep_stream = (advanced_buffering and c_in <= 256 and c_out <= 256
                   and total_steps >= 4)
    stream_bufs = 3 if deep_stream else None
    w_bufs = 1 if (advanced_buffering and w_invariant) else None
    b_bufs = 1 if (advanced_buffering and grid_co == 1) else None

    cap = _vmem_capacity_bytes()
    if grid_k > 1:
        dim_sem = ("parallel", "arbitrary", "arbitrary")
    else:
        # C_out axis "arbitrary": keeps megacore sharding on rows only, so
        # each TC streams half of feats and the (smaller) weight once.
        dim_sem = ("parallel", "arbitrary")
    compiler_params = pltpu.CompilerParams(
        dimension_semantics=dim_sem,
        # Raise the scoped-VMEM limit (v5e default is only 16 MiB) but leave
        # ~8 MiB of physical VMEM for Mosaic-internal scratch / semaphores.
        vmem_limit_bytes=int(min(cap - 8 * 2 ** 20,
                                 max(32 * 2 ** 20, needed + 8 * 2 ** 20))),
    )

    # Advisory cost: weight is re-read grid_n times when it is tiled along
    # C_out or K; feats are re-read grid_co times when both C_out and K tile.
    w_reads = grid_n if (grid_co > 1 or grid_k > 1) else 1
    x_reads = grid_co if grid_k > 1 else 1
    cost = pl.CostEstimate(
        flops=2 * n * c_in * c_out,
        transcendentals=0,
        bytes_accessed=(x_reads * n * c_in * in_item
                        + w_reads * c_in * c_out * w_item
                        + n * c_out * out_item
                        + (c_out * 4 if bias is not None else 0)),
    )
    out_shape = jax.ShapeDtypeStruct((n, c_out), out_dtype)

    has_bias = bias is not None
    b2d = bias.reshape(1, c_out) if has_bias else None

    if grid_k == 1:
        x_spec = _spec((tn, c_in), lambda i, j: (i, 0), buffers=stream_bufs)
        w_spec = _spec((c_in, tco), lambda i, j: (0, j), buffers=w_bufs)
        # TODO(synk): C_out<128 layers store via masked vst (half throughput);
        # a lane-dense repacked output slab would lift this.
        o_spec = _spec((tn, tco), lambda i, j: (i, j), buffers=stream_bufs)
        in_specs = [x_spec, w_spec]
        operands = [feats, weight_t]
        kernel = _linear_kernel_nobias
        if has_bias:
            in_specs.append(_spec((1, tco), lambda i, j: (0, j), buffers=b_bufs))
            operands.append(b2d)
            kernel = _linear_kernel
        grid = (grid_n, grid_co)
        scratch = []
    else:
        x_spec = _spec((tn, tk), lambda i, j, k: (i, k), buffers=stream_bufs)
        w_spec = _spec((tk, tco), lambda i, j, k: (k, j), buffers=w_bufs)
        o_spec = _spec((tn, tco), lambda i, j, k: (i, j), buffers=stream_bufs)
        in_specs = [x_spec, w_spec]
        operands = [feats, weight_t]
        kernel = _linear_kernel_k_nobias
        if has_bias:
            in_specs.append(
                _spec((1, tco), lambda i, j, k: (0, j), buffers=b_bufs))
            operands.append(b2d)
            kernel = _linear_kernel_k
        grid = (grid_n, grid_co, grid_k)
        scratch = [pltpu.VMEM((tn, tco), jnp.float32)]

    return pl.pallas_call(
        kernel,
        out_shape=out_shape,
        grid_spec=pltpu.PrefetchScalarGridSpec(
            num_scalar_prefetch=0,
            grid=grid,
            in_specs=in_specs,
            out_specs=o_spec,
            scratch_shapes=scratch,
        ),
        compiler_params=compiler_params,
        cost_estimate=cost,
    )(*operands)


_ADVANCED_BUFFERING_OK = True


def minkowski_linear_features(feats, weight_t, bias=None, *, tile_n=None,
                              force_tile_k=None):
    """out = feats @ weight_t + bias  (weight_t is the pre-transposed weight)."""
    global _ADVANCED_BUFFERING_OK
    if _ADVANCED_BUFFERING_OK:
        try:
            return _linear_features_impl(
                feats, weight_t, bias, tile_n=tile_n,
                force_tile_k=force_tile_k, advanced_buffering=True)
        except (TypeError, ValueError, NotImplementedError,
                pltpu.LoweringException):
            # Only pl.Buffered / pipeline_mode support failures are expected
            # here; a genuine shape/tracing bug re-raises from the retry below.
            _ADVANCED_BUFFERING_OK = False
    return _linear_features_impl(
        feats, weight_t, bias, tile_n=tile_n,
        force_tile_k=force_tile_k, advanced_buffering=False)


# ---------------------------------------------------------------------------
# Module mirror
# ---------------------------------------------------------------------------
class MinkowskiLinear:
    """JAX mirror of MinkowskiEngine's MinkowskiLinear.

    Applies a dense linear layer to the feature matrix of a "sparse tensor";
    coordinates / coords_key / coords_manager bookkeeping carry no compute and
    are passed through unchanged.
    """

    def __init__(self, in_features, out_features, bias=True, *, key,
                 param_dtype=jnp.float32):
        self.in_features = in_features
        self.out_features = out_features
        kw, kb = jax.random.split(key)
        bound = 1.0 / (in_features ** 0.5)
        # PyTorch nn.Linear convention: weight is (out_features, in_features),
        # init U(-1/sqrt(in), 1/sqrt(in)).
        self.weight = jax.random.uniform(
            kw, (out_features, in_features), jnp.float32, -bound, bound)
        # Pre-transpose ONCE; optional bf16 storage halves weight HBM traffic
        # and matches the MXU's native input format on v6e/v7x.
        self.weight_t = self.weight.T.astype(param_dtype)
        # Bias is tiny (C_out elems): keep it f32 for accuracy at zero cost.
        self.bias = (jax.random.uniform(
            kb, (out_features,), jnp.float32, -bound, bound)
            if bias else None)

    def __call__(self, feats, coords):
        # "SparseTensor" stand-in: (features, coords); coords pass through.
        out_f = minkowski_linear_features(feats, self.weight_t, self.bias)
        return out_f, coords


if __name__ == "__main__":
    key = jax.random.PRNGKey(0)
    k_feat, k_coord, k_p1, k_feat2, k_p2 = jax.random.split(key, 5)

    # ---- Test 1: f32, small channels (matches typical MinkowskiLinear use).
    n_points, in_features, out_features = 200, 32, 64
    feats = jax.random.normal(k_feat, (n_points, in_features), jnp.float32)
    coords = jax.random.randint(k_coord, (n_points, 4), 0, 16, jnp.int32)

    layer = MinkowskiLinear(in_features, out_features, bias=True, key=k_p1)
    out_f, out_coords = layer(feats, coords)
    out_f = jax.block_until_ready(out_f)

    ref = feats @ layer.weight.T + layer.bias
    assert out_f.shape == (n_points, out_features)
    assert out_coords.shape == coords.shape
    assert jnp.allclose(out_f, ref, atol=1e-5, rtol=1e-5)

    # ---- Test 2: bf16 params/feats + forced K ("arbitrary") reduction path.
    n2, c_in2, c_out2 = 384, 256, 128
    layer2 = MinkowskiLinear(c_in2, c_out2, bias=True, key=k_p2,
                             param_dtype=jnp.bfloat16)
    feats2 = jax.random.normal(k_feat2, (n2, c_in2), jnp.bfloat16)
    out2 = minkowski_linear_features(feats2, layer2.weight_t, layer2.bias,
                                     force_tile_k=128)
    out2 = jax.block_until_ready(out2)
    ref2 = (feats2.astype(jnp.float32) @ layer2.weight_t.astype(jnp.float32)
            + layer2.bias)
    assert out2.shape == (n2, c_out2)
    assert jnp.allclose(out2.astype(jnp.float32), ref2, atol=2e-1, rtol=5e-2)

    print("KERNEL_OK")
</pallas_src>

<mosaic_0001>
module attributes {stable_mosaic.version = 11 : i64} {
  func.func @_linear_kernel(%arg0: i32, %arg1: i32, %arg2: memref<256x32xf32, #tpu.memory_space<vmem>>, %arg3: memref<32x64xf32, #tpu.memory_space<vmem>>, %arg4: memref<1x64xf32, #tpu.memory_space<vmem>>, %arg5: memref<256x64xf32, #tpu.memory_space<vmem>>) attributes {dimension_semantics = [#tpu.dimension_semantics<parallel>, #tpu.dimension_semantics<arbitrary>], iteration_bounds = array<i64: 1, 1>, scalar_prefetch = 0 : i64, scratch_operands = 0 : i64, tpu.core_type = #tpu.core_type<tc>, window_params = [{transform_indices = @transform_0, window_bounds = array<i64: 256, 32>}, {pipeline_mode = #tpu.pipeline_mode<synchronous>, transform_indices = @transform_1, window_bounds = array<i64: 32, 64>}, {pipeline_mode = #tpu.pipeline_mode<synchronous>, transform_indices = @transform_2, window_bounds = array<i64: 1, 64>}, {transform_indices = @transform_3, window_bounds = array<i64: 256, 64>}]} {
    %c0 = arith.constant 0 : index
    %c0_0 = arith.constant 0 : index
    %0 = vector.load %arg2[%c0, %c0_0] : memref<256x32xf32, #tpu.memory_space<vmem>>, vector<256x32xf32>
    %c0_1 = arith.constant 0 : index
    %c0_2 = arith.constant 0 : index
    %1 = vector.load %arg3[%c0_1, %c0_2] : memref<32x64xf32, #tpu.memory_space<vmem>>, vector<32x64xf32>
    %cst = arith.constant dense<0.000000e+00> : vector<256x64xf32>
    %2 = tpu.matmul %0, %1, %cst {dimension_numbers = #tpu.dot_dimension_numbers<[1], [0], [0], [1], [0, 0, 1, 1], [], []>} : vector<256x32xf32>, vector<32x64xf32>, vector<256x64xf32> -> vector<256x64xf32>
    %c0_3 = arith.constant 0 : index
    %c0_4 = arith.constant 0 : index
    %3 = vector.load %arg4[%c0_3, %c0_4] : memref<1x64xf32, #tpu.memory_space<vmem>>, vector<1x64xf32>
    %4 = vector.broadcast %3 : vector<1x64xf32> to vector<256x64xf32>
    %5 = arith.addf %2, %4 : vector<256x64xf32>
    %c0_5 = arith.constant 0 : index
    %c0_6 = arith.constant 0 : index
    %6 = vector.load %arg5[%c0_5, %c0_6] : memref<256x64xf32, #tpu.memory_space<vmem>>, vector<256x64xf32>
    tpu.vector_store %arg5[%c0_5, %c0_6], %5 {strides = array<i32>} : memref<256x64xf32, #tpu.memory_space<vmem>>, vector<256x64xf32>,
    return
  }
  func.func @transform_0(%arg0: i32, %arg1: i32) -> (i32, i32) {
    %c0_i32 = arith.constant 0 : i32
    %c0_i32_0 = arith.constant 0 : i32
    return %arg0, %c0_i32 : i32, i32
  }
  func.func @transform_1(%arg0: i32, %arg1: i32) -> (i32, i32) {
    %c0_i32 = arith.constant 0 : i32
    %c0_i32_0 = arith.constant 0 : i32
    return %c0_i32, %arg1 : i32, i32
  }
  func.func @transform_2(%arg0: i32, %arg1: i32) -> (i32, i32) {
    %c0_i32 = arith.constant 0 : i32
    %c0_i32_0 = arith.constant 0 : i32
    return %c0_i32, %arg1 : i32, i32
  }
  func.func @transform_3(%arg0: i32, %arg1: i32) -> (i32, i32) {
    %c0_i32 = arith.constant 0 : i32
    return %arg0, %arg1 : i32, i32
  }
}

</mosaic_0001>

<llo_original>
// kernel: _linear_features_impl.1
$region0: #{_linear_features_impl.1}
  #allocation0 [shape = 'u32[]', space=smem, size = 0x4, offset = 0x4, fixed_abs, tag = 'smem constant byte address 0x4 - core index']
  #allocation1 [shape = 'u32[72,128]{1,0:T(1,128)}', space=vmem, size = 0x9000, scoped, tag = 'internal scratch']
  %s0 = inlined_call_operand.vmem [shape: f32[200,32], index: 0, kind: input, shape index: {}]
  %s1 = inlined_call_operand.vmem [shape: f32[32,64], index: 1, kind: input, shape index: {}]
  %s2 = inlined_call_operand.vmem [shape: f32[1,64], index: 2, kind: input, shape index: {}]
  %s3 = inlined_call_operand.vmem [shape: f32[200,64], index: 3, kind: output, shape index: {}]
  %s4 = sld [smem:[#allocation0]]
  $region56: #{_linear_features_impl.1} parent=0
    _
  %s6 = ssub.s32 1, %s4
  %s7 = scalar_select 0, %s6, %s4
  $region1: #{_linear_features_impl.1} parent=0
    #allocation2 [shape = 'u8[131072]{0}', space=vmem, size = 0x20000, scoped, tag = 'output window, operand 0, single buffered']
    // Predicated region
    $region2: #{_linear_features_impl.1} parent=1 // pred_check
      _
    $region3: #{_linear_features_impl.1} parent=1 // pred_check_branch
      %9 = sbr.rel (0) target = $region5
    $region4: #{_linear_features_impl.1} parent=1 // pred_region
      _
    $region5: #{_linear_features_impl.1} parent=1 // pred_fallthru
      _
    // Predicated region
    $region6: #{_linear_features_impl.1} parent=1 // pred_check
      _
    $region7: #{_linear_features_impl.1} parent=1 // pred_check_branch
      %11 = sbr.rel (0) target = $region9
    $region8: #{_linear_features_impl.1} parent=1 // pred_region
      _
    $region9: #{_linear_features_impl.1} parent=1 // pred_fallthru
      _
    // Predicated region
    $region10: #{_linear_features_impl.1} parent=1 // pred_check
      _
    $region11: #{_linear_features_impl.1} parent=1 // pred_check_branch
      %13 = sbr.rel (0) target = $region13
    $region12: #{_linear_features_impl.1} parent=1 // pred_region
      _
    $region13: #{_linear_features_impl.1} parent=1 // pred_fallthru
      _
    %v14 = vld [vmem:[%s0] sm:$0xff]
    %v15 = vld [vmem:[%s0 + $0x8] sm:$0xff]
    %v16 = vld [vmem:[%s0 + $0x10] sm:$0xff]
    %v17 = vld [vmem:[%s0 + $0x18] sm:$0xff]
    %v18 = vld [vmem:[%s0 + $0x20] sm:$0xff]
    %v19 = vld [vmem:[%s0 + $0x28] sm:$0xff]
    %v20 = vld [vmem:[%s0 + $0x30] sm:$0xff]
    %v21 = vld [vmem:[%s0 + $0x38] sm:$0xff]
    %v22 = vld [vmem:[%s0 + $0x40] sm:$0xff]
    %v23 = vld [vmem:[%s0 + $0x48] sm:$0xff]
    %v24 = vld [vmem:[%s0 + $0x50] sm:$0xff]
    %v25 = vld [vmem:[%s0 + $0x58] sm:$0xff]
    %v26 = vld [vmem:[%s0 + $0x60] sm:$0xff]
    %v27 = vld [vmem:[%s0 + $0x68] sm:$0xff]
    %v28 = vld [vmem:[%s0 + $0x70] sm:$0xff]
    %v29 = vld [vmem:[%s0 + $0x78] sm:$0xff]
    %v30 = vld [vmem:[%s0 + $0x80] sm:$0xff]
    %v31 = vld [vmem:[%s0 + $0x88] sm:$0xff]
    %v32 = vld [vmem:[%s0 + $0x90] sm:$0xff]
    %v33 = vld [vmem:[%s0 + $0x98] sm:$0xff]
    %v34 = vld [vmem:[%s0 + $0xa0] sm:$0xff]
    %v35 = vld [vmem:[%s0 + $0xa8] sm:$0xff]
    %v36 = vld [vmem:[%s0 + $0xb0] sm:$0xff]
    %v37 = vld [vmem:[%s0 + $0xb8] sm:$0xff]
    %v38 = vld [vmem:[%s0 + $0xc0] sm:$0xff]
    %v39 = vld [vmem:[%s0 + $0xc8] sm:$0xff]
    %v40 = vld [vmem:[%s0 + $0xd0] sm:$0xff]
    %v41 = vld [vmem:[%s0 + $0xd8] sm:$0xff]
    %v42 = vld [vmem:[%s0 + $0xe0] sm:$0xff]
    %v43 = vld [vmem:[%s0 + $0xe8] sm:$0xff]
    %v44 = vld [vmem:[%s0 + $0xf0] sm:$0xff]
    %v45 = vld [vmem:[%s0 + $0xf8] sm:$0xff]
    %v46 = vld [vmem:[%s1] sm:$0xff]
    %v47 = vld [vmem:[%s1 + $0x8] sm:$0xff]
    %v48 = vld [vmem:[%s1 + $0x10] sm:$0xff]
    %v49 = vld [vmem:[%s1 + $0x18] sm:$0xff]
    %v50 = vld [vmem:[%s2] sm:$0x1]
    %v52 = vperm.slane %v50, 0
    %vm54 = vcmask 261120
    %v56 = vsel %vm54, %v14, 0
    %v59 = vsel %vm54, %v15, 0
    %v62 = vsel %vm54, %v16, 0
    %v65 = vsel %vm54, %v17, 0
    %v68 = vsel %vm54, %v18, 0
    %v71 = vsel %vm54, %v19, 0
    %v74 = vsel %vm54, %v20, 0
    %v77 = vsel %vm54, %v21, 0
    %v80 = vsel %vm54, %v22, 0
    %v83 = vsel %vm54, %v23, 0
    %v86 = vsel %vm54, %v24, 0
    %v89 = vsel %vm54, %v25, 0
    %v92 = vsel %vm54, %v26, 0
    %v95 = vsel %vm54, %v27, 0
    %v98 = vsel %vm54, %v28, 0
    %v101 = vsel %vm54, %v29, 0
    %v104 = vsel %vm54, %v30, 0
    %v107 = vsel %vm54, %v31, 0
    %v110 = vsel %vm54, %v32, 0
    %v113 = vsel %vm54, %v33, 0
    %v116 = vsel %vm54, %v34, 0
    %v119 = vsel %vm54, %v35, 0
    %v122 = vsel %vm54, %v36, 0
    %v125 = vsel %vm54, %v37, 0
    %v128 = vsel %vm54, %v38, 0
    %v131 = vsel %vm54, %v39, 0
    %v134 = vsel %vm54, %v40, 0
    %v137 = vsel %vm54, %v41, 0
    %v140 = vsel %vm54, %v42, 0
    %v143 = vsel %vm54, %v43, 0
    %v146 = vsel %vm54, %v44, 0
    %v149 = vsel %vm54, %v45, 0
    %151 = vmatpush.msra.mxu0 0.0
    %152 = vmatpush.msra.mxu0 0.0
    %153 = vmatpush.msra.mxu0 0.0
    %154 = vmatpush.msra.mxu0 0.0
    %155 = vmatpush.msra.mxu0 0.0
    %156 = vmatpush.msra.mxu0 0.0
    %157 = vmatpush.msra.mxu0 0.0
    %158 = vmatpush.msra.mxu0 0.0
    %159 = vmatpush.msra.mxu0 0.0
    %160 = vmatpush.msra.mxu0 0.0
    %161 = vmatpush.msra.mxu0 0.0
    %162 = vmatpush.msra.mxu0 0.0
    %163 = vmatpush.msra.mxu0 %v49
    %164 = vmatpush.msra.mxu0 %v48
    %165 = vmatpush.msra.mxu0 %v47
    %166 = vmatpush.msra.mxu0 %v46
    %167 = vmatmul.f32.gmra.mxu0 %v56
    %v168 = vpop.f32.mrf.mxu0
    %v169 = vadd.f32 %v52, %v168
    %170 = vmatmul.f32.gmra.mxu0 %v59
    %v171 = vpop.f32.mrf.mxu0
    %v172 = vadd.f32 %v52, %v171
    %173 = vmatmul.f32.gmra.mxu0 %v62
    %v174 = vpop.f32.mrf.mxu0
    %v175 = vadd.f32 %v52, %v174
    %176 = vmatmul.f32.gmra.mxu0 %v65
    %v177 = vpop.f32.mrf.mxu0
    %v178 = vadd.f32 %v52, %v177
    %179 = vmatmul.f32.gmra.mxu0 %v68
    %v180 = vpop.f32.mrf.mxu0
    %v181 = vadd.f32 %v52, %v180
    %182 = vmatmul.f32.gmra.mxu0 %v71
    %v183 = vpop.f32.mrf.mxu0
    %v184 = vadd.f32 %v52, %v183
    %185 = vmatmul.f32.gmra.mxu0 %v74
    %v186 = vpop.f32.mrf.mxu0
    %v187 = vadd.f32 %v52, %v186
    %188 = vmatmul.f32.gmra.mxu0 %v77
    %v189 = vpop.f32.mrf.mxu0
    %v190 = vadd.f32 %v52, %v189
    %191 = vmatmul.f32.gmra.mxu0 %v80
    %v192 = vpop.f32.mrf.mxu0
    %v193 = vadd.f32 %v52, %v192
    %194 = vmatmul.f32.gmra.mxu0 %v83
    %v195 = vpop.f32.mrf.mxu0
    %v196 = vadd.f32 %v52, %v195
    %197 = vmatmul.f32.gmra.mxu0 %v86
    %v198 = vpop.f32.mrf.mxu0
    %v199 = vadd.f32 %v52, %v198
    %200 = vmatmul.f32.gmra.mxu0 %v89
    %v201 = vpop.f32.mrf.mxu0
    %v202 = vadd.f32 %v52, %v201
    %203 = vmatmul.f32.gmra.mxu0 %v92
    %v204 = vpop.f32.mrf.mxu0
    %v205 = vadd.f32 %v52, %v204
    %206 = vmatmul.f32.gmra.mxu0 %v95
    %v207 = vpop.f32.mrf.mxu0
    %v208 = vadd.f32 %v52, %v207
    %209 = vmatmul.f32.gmra.mxu0 %v98
    %v210 = vpop.f32.mrf.mxu0
    %v211 = vadd.f32 %v52, %v210
    %212 = vmatmul.f32.gmra.mxu0 %v101
    %v213 = vpop.f32.mrf.mxu0
    %v214 = vadd.f32 %v52, %v213
    %215 = vmatmul.f32.gmra.mxu0 %v104
    %v216 = vpop.f32.mrf.mxu0
    %v217 = vadd.f32 %v52, %v216
    %218 = vmatmul.f32.gmra.mxu0 %v107
    %v219 = vpop.f32.mrf.mxu0
    %v220 = vadd.f32 %v52, %v219
    %221 = vmatmul.f32.gmra.mxu0 %v110
    %v222 = vpop.f32.mrf.mxu0
    %v223 = vadd.f32 %v52, %v222
    %224 = vmatmul.f32.gmra.mxu0 %v113
    %v225 = vpop.f32.mrf.mxu0
    %v226 = vadd.f32 %v52, %v225
    %227 = vmatmul.f32.gmra.mxu0 %v116
    %v228 = vpop.f32.mrf.mxu0
    %v229 = vadd.f32 %v52, %v228
    %230 = vmatmul.f32.gmra.mxu0 %v119
    %v231 = vpop.f32.mrf.mxu0
    %v232 = vadd.f32 %v52, %v231
    %233 = vmatmul.f32.gmra.mxu0 %v122
    %v234 = vpop.f32.mrf.mxu0
    %v235 = vadd.f32 %v52, %v234
    %236 = vmatmul.f32.gmra.mxu0 %v125
    %v237 = vpop.f32.mrf.mxu0
    %v238 = vadd.f32 %v52, %v237
    %239 = vmatmul.f32.gmra.mxu0 %v128
    %v240 = vpop.f32.mrf.mxu0
    %v241 = vadd.f32 %v52, %v240
    %242 = vmatmul.f32.gmra.mxu0 %v131
    %v243 = vpop.f32.mrf.mxu0
    %v244 = vadd.f32 %v52, %v243
    %245 = vmatmul.f32.gmra.mxu0 %v134
    %v246 = vpop.f32.mrf.mxu0
    %v247 = vadd.f32 %v52, %v246
    %248 = vmatmul.f32.gmra.mxu0 %v137
    %v249 = vpop.f32.mrf.mxu0
    %v250 = vadd.f32 %v52, %v249
    %251 = vmatmul.f32.gmra.mxu0 %v140
    %v252 = vpop.f32.mrf.mxu0
    %v253 = vadd.f32 %v52, %v252
    %254 = vmatmul.f32.gmra.mxu0 %v143
    %v255 = vpop.f32.mrf.mxu0
    %v256 = vadd.f32 %v52, %v255
    %257 = vmatmul.f32.gmra.mxu0 %v146
    %v258 = vpop.f32.mrf.mxu0
    %v259 = vadd.f32 %v52, %v258
    %260 = vmatmul.f32.gmra.mxu0 %v149
    %v261 = vpop.f32.mrf.mxu0
    %v262 = vadd.f32 %v52, %v261
    %263 = vdwg.mxu0
    %vm264 = vcmask 523264
    %265 = vst.msk [vmem:[#allocation2] sm:$0xff] %vm264, %v169
    %266 = vst.msk [vmem:[#allocation2 + $0x8] sm:$0xff] %vm264, %v172
    %267 = vst.msk [vmem:[#allocation2 + $0x10] sm:$0xff] %vm264, %v175
    %268 = vst.msk [vmem:[#allocation2 + $0x18] sm:$0xff] %vm264, %v178
    %269 = vst.msk [vmem:[#allocation2 + $0x20] sm:$0xff] %vm264, %v181
    %270 = vst.msk [vmem:[#allocation2 + $0x28] sm:$0xff] %vm264, %v184
    %271 = vst.msk [vmem:[#allocation2 + $0x30] sm:$0xff] %vm264, %v187
    %272 = vst.msk [vmem:[#allocation2 + $0x38] sm:$0xff] %vm264, %v190
    %273 = vst.msk [vmem:[#allocation2 + $0x40] sm:$0xff] %vm264, %v193
    %274 = vst.msk [vmem:[#allocation2 + $0x48] sm:$0xff] %vm264, %v196
    %275 = vst.msk [vmem:[#allocation2 + $0x50] sm:$0xff] %vm264, %v199
    %276 = vst.msk [vmem:[#allocation2 + $0x58] sm:$0xff] %vm264, %v202
    %277 = vst.msk [vmem:[#allocation2 + $0x60] sm:$0xff] %vm264, %v205
    %278 = vst.msk [vmem:[#allocation2 + $0x68] sm:$0xff] %vm264, %v208
    %279 = vst.msk [vmem:[#allocation2 + $0x70] sm:$0xff] %vm264, %v211
    %280 = vst.msk [vmem:[#allocation2 + $0x78] sm:$0xff] %vm264, %v214
    %281 = vst.msk [vmem:[#allocation2 + $0x80] sm:$0xff] %vm264, %v217
    %282 = vst.msk [vmem:[#allocation2 + $0x88] sm:$0xff] %vm264, %v220
    %283 = vst.msk [vmem:[#allocation2 + $0x90] sm:$0xff] %vm264, %v223
    %284 = vst.msk [vmem:[#allocation2 + $0x98] sm:$0xff] %vm264, %v226
    %285 = vst.msk [vmem:[#allocation2 + $0xa0] sm:$0xff] %vm264, %v229
    %286 = vst.msk [vmem:[#allocation2 + $0xa8] sm:$0xff] %vm264, %v232
    %287 = vst.msk [vmem:[#allocation2 + $0xb0] sm:$0xff] %vm264, %v235
    %288 = vst.msk [vmem:[#allocation2 + $0xb8] sm:$0xff] %vm264, %v238
    %289 = vst.msk [vmem:[#allocation2 + $0xc0] sm:$0xff] %vm264, %v241
    %290 = vst.msk [vmem:[#allocation2 + $0xc8] sm:$0xff] %vm264, %v244
    %291 = vst.msk [vmem:[#allocation2 + $0xd0] sm:$0xff] %vm264, %v247
    %292 = vst.msk [vmem:[#allocation2 + $0xd8] sm:$0xff] %vm264, %v250
    %293 = vst.msk [vmem:[#allocation2 + $0xe0] sm:$0xff] %vm264, %v253
    %294 = vst.msk [vmem:[#allocation2 + $0xe8] sm:$0xff] %vm264, %v256
    %295 = vst.msk [vmem:[#allocation2 + $0xf0] sm:$0xff] %vm264, %v259
    %296 = vst.msk [vmem:[#allocation2 + $0xf8] sm:$0xff] %vm264, %v262
    // Predicated region
    $region14: #{_linear_features_impl.1} parent=1 // pred_check
      _
    $region15: #{_linear_features_impl.1} parent=1 // pred_check_branch
      %298 = sbr.rel (0) target = $region17
    $region16: #{_linear_features_impl.1} parent=1 // pred_region
      // Predicated region
      $region18: #{_linear_features_impl.1} parent=16 // pred_check
        _
      $region19: #{_linear_features_impl.1} parent=16 // pred_check_branch
        %300 = sbr.rel (0) target = $region21
      $region20: #{_linear_features_impl.1} parent=16 // pred_region
        // Predicated region
        $region22: #{_linear_features_impl.1} parent=20 // pred_check
          _
        $region23: #{_linear_features_impl.1} parent=20 // pred_check_branch
          %302 = sbr.rel (0) target = $region25
        $region24: #{_linear_features_impl.1} parent=20 // pred_region
          // Predicated region
          $region37: #{_linear_features_impl.1} parent=24 // pred_check
            _
          $region38: #{_linear_features_impl.1} parent=24 // pred_check_branch
            %366 = sbr.rel (0) target = $region40
          $region39: #{_linear_features_impl.1} parent=24 // pred_region
            loop: start=0, step=1, limit=1
            $region41: #{_linear_features_impl.1} parent=39 // loop_pre_header
              _
            $region42: #{_linear_features_impl.1} parent=39 // loop_header
              %s368 = sphi 0, %s372
              %p369 = scmp.ge.s32.totalorder %s368, 1
              %s373 = sphi [#allocation2], [#allocation2]
              %s374 = sphi %s3, %s3
            $region43: #{_linear_features_impl.1} parent=39 // loop_header_branch
              %371 = sbr.rel (%p369) target = $region47
            $region44: #{_linear_features_impl.1} parent=39 // loop_body
              %v375 = vld [vmem:[%s373] sm:$0xff]
              %376 = vst [vmem:[%s374] sm:$0xff] %v375
              %v377 = vld [vmem:[%s373 + $0x8] sm:$0xff]
              %378 = vst [vmem:[%s374 + $0x8] sm:$0xff] %v377
              %v379 = vld [vmem:[%s373 + $0x10] sm:$0xff]
              %380 = vst [vmem:[%s374 + $0x10] sm:$0xff] %v379
              %v381 = vld [vmem:[%s373 + $0x18] sm:$0xff]
              %382 = vst [vmem:[%s374 + $0x18] sm:$0xff] %v381
              %v383 = vld [vmem:[%s373 + $0x20] sm:$0xff]
              %384 = vst [vmem:[%s374 + $0x20] sm:$0xff] %v383
              %v385 = vld [vmem:[%s373 + $0x28] sm:$0xff]
              %386 = vst [vmem:[%s374 + $0x28] sm:$0xff] %v385
              %v387 = vld [vmem:[%s373 + $0x30] sm:$0xff]
              %388 = vst [vmem:[%s374 + $0x30] sm:$0xff] %v387
              %v389 = vld [vmem:[%s373 + $0x38] sm:$0xff]
              %390 = vst [vmem:[%s374 + $0x38] sm:$0xff] %v389
              %v391 = vld [vmem:[%s373 + $0x40] sm:$0xff]
              %392 = vst [vmem:[%s374 + $0x40] sm:$0xff] %v391
              %v393 = vld [vmem:[%s373 + $0x48] sm:$0xff]
              %394 = vst [vmem:[%s374 + $0x48] sm:$0xff] %v393
              %v395 = vld [vmem:[%s373 + $0x50] sm:$0xff]
              %396 = vst [vmem:[%s374 + $0x50] sm:$0xff] %v395
              %v397 = vld [vmem:[%s373 + $0x58] sm:$0xff]
              %398 = vst [vmem:[%s374 + $0x58] sm:$0xff] %v397
              %v399 = vld [vmem:[%s373 + $0x60] sm:$0xff]
              %400 = vst [vmem:[%s374 + $0x60] sm:$0xff] %v399
              %v401 = vld [vmem:[%s373 + $0x68] sm:$0xff]
              %402 = vst [vmem:[%s374 + $0x68] sm:$0xff] %v401
              %v403 = vld [vmem:[%s373 + $0x70] sm:$0xff]
              %404 = vst [vmem:[%s374 + $0x70] sm:$0xff] %v403
              %v405 = vld [vmem:[%s373 + $0x78] sm:$0xff]
              %406 = vst [vmem:[%s374 + $0x78] sm:$0xff] %v405
              %v407 = vld [vmem:[%s373 + $0x80] sm:$0xff]
              %408 = vst [vmem:[%s374 + $0x80] sm:$0xff] %v407
              %v409 = vld [vmem:[%s373 + $0x88] sm:$0xff]
              %410 = vst [vmem:[%s374 + $0x88] sm:$0xff] %v409
              %v411 = vld [vmem:[%s373 + $0x90] sm:$0xff]
              %412 = vst [vmem:[%s374 + $0x90] sm:$0xff] %v411
              %v413 = vld [vmem:[%s373 + $0x98] sm:$0xff]
              %414 = vst [vmem:[%s374 + $0x98] sm:$0xff] %v413
              %v415 = vld [vmem:[%s373 + $0xa0] sm:$0xff]
              %416 = vst [vmem:[%s374 + $0xa0] sm:$0xff] %v415
              %v417 = vld [vmem:[%s373 + $0xa8] sm:$0xff]
              %418 = vst [vmem:[%s374 + $0xa8] sm:$0xff] %v417
              %v419 = vld [vmem:[%s373 + $0xb0] sm:$0xff]
              %420 = vst [vmem:[%s374 + $0xb0] sm:$0xff] %v419
              %v421 = vld [vmem:[%s373 + $0xb8] sm:$0xff]
              %422 = vst [vmem:[%s374 + $0xb8] sm:$0xff] %v421
              %v423 = vld [vmem:[%s373 + $0xc0] sm:$0xff]
              %424 = vst [vmem:[%s374 + $0xc0] sm:$0xff] %v423
            $region45: #{_linear_features_impl.1} parent=39 // loop_footer
              %s372 = sadd.s32 1, %s368
            $region46: #{_linear_features_impl.1} parent=39 // loop_footer_branch
              %367 = sbr.rel target = $region42
            $region47: #{_linear_features_impl.1} parent=39 // loop_exit
              _
          $region40: #{_linear_features_impl.1} parent=24 // pred_fallthru
            _
          // Predicated region
          $region48: #{_linear_features_impl.1} parent=24 // pred_check
            _
          $region49: #{_linear_features_impl.1} parent=24 // pred_check_branch
            %426 = sbr.rel target = $region51
          $region50: #{_linear_features_impl.1} parent=24 // pred_region
            _
          $region51: #{_linear_features_impl.1} parent=24 // pred_fallthru
            _
        $region25: #{_linear_features_impl.1} parent=20 // pred_fallthru
          _
        // Predicated region
        $region26: #{_linear_features_impl.1} parent=20 // pred_check
          _
        $region27: #{_linear_features_impl.1} parent=20 // pred_check_branch
          %304 = sbr.rel target = $region29
        $region28: #{_linear_features_impl.1} parent=20 // pred_region
          %s306 = ssub.s32 256, 1
          loop: start=0, step=1, limit=1
          $region30: #{_linear_features_impl.1} parent=28 // loop_pre_header
            _
          $region31: #{_linear_features_impl.1} parent=28 // loop_header
            %s308 = sphi 0, %s312
            %p309 = scmp.ge.s32.totalorder %s308, 1
            %s313 = sphi [#allocation2], [#allocation2]
            %s314 = sphi %s3, %s3
          $region32: #{_linear_features_impl.1} parent=28 // loop_header_branch
            %311 = sbr.rel (%p309) target = $region36
          $region33: #{_linear_features_impl.1} parent=28 // loop_body
            %v315 = vld [vmem:[%s313] sm:%s306]
            %316 = vst [vmem:[%s314] sm:%s306] %v315
            %v317 = vld [vmem:[%s313 + $0x8] sm:%s306]
            %318 = vst [vmem:[%s314 + $0x8] sm:%s306] %v317
            %v319 = vld [vmem:[%s313 + $0x10] sm:%s306]
            %320 = vst [vmem:[%s314 + $0x10] sm:%s306] %v319
            %v321 = vld [vmem:[%s313 + $0x18] sm:%s306]
            %322 = vst [vmem:[%s314 + $0x18] sm:%s306] %v321
            %v323 = vld [vmem:[%s313 + $0x20] sm:%s306]
            %324 = vst [vmem:[%s314 + $0x20] sm:%s306] %v323
            %v325 = vld [vmem:[%s313 + $0x28] sm:%s306]
            %326 = vst [vmem:[%s314 + $0x28] sm:%s306] %v325
            %v327 = vld [vmem:[%s313 + $0x30] sm:%s306]
            %328 = vst [vmem:[%s314 + $0x30] sm:%s306] %v327
            %v329 = vld [vmem:[%s313 + $0x38] sm:%s306]
            %330 = vst [vmem:[%s314 + $0x38] sm:%s306] %v329
            %v331 = vld [vmem:[%s313 + $0x40] sm:%s306]
            %332 = vst [vmem:[%s314 + $0x40] sm:%s306] %v331
            %v333 = vld [vmem:[%s313 + $0x48] sm:%s306]
            %334 = vst [vmem:[%s314 + $0x48] sm:%s306] %v333
            %v335 = vld [vmem:[%s313 + $0x50] sm:%s306]
            %336 = vst [vmem:[%s314 + $0x50] sm:%s306] %v335
            %v337 = vld [vmem:[%s313 + $0x58] sm:%s306]
            %338 = vst [vmem:[%s314 + $0x58] sm:%s306] %v337
            %v339 = vld [vmem:[%s313 + $0x60] sm:%s306]
            %340 = vst [vmem:[%s314 + $0x60] sm:%s306] %v339
            %v341 = vld [vmem:[%s313 + $0x68] sm:%s306]
            %342 = vst [vmem:[%s314 + $0x68] sm:%s306] %v341
            %v343 = vld [vmem:[%s313 + $0x70] sm:%s306]
            %344 = vst [vmem:[%s314 + $0x70] sm:%s306] %v343
            %v345 = vld [vmem:[%s313 + $0x78] sm:%s306]
            %346 = vst [vmem:[%s314 + $0x78] sm:%s306] %v345
            %v347 = vld [vmem:[%s313 + $0x80] sm:%s306]
            %348 = vst [vmem:[%s314 + $0x80] sm:%s306] %v347
            %v349 = vld [vmem:[%s313 + $0x88] sm:%s306]
            %350 = vst [vmem:[%s314 + $0x88] sm:%s306] %v349
            %v351 = vld [vmem:[%s313 + $0x90] sm:%s306]
            %352 = vst [vmem:[%s314 + $0x90] sm:%s306] %v351
            %v353 = vld [vmem:[%s313 + $0x98] sm:%s306]
            %354 = vst [vmem:[%s314 + $0x98] sm:%s306] %v353
            %v355 = vld [vmem:[%s313 + $0xa0] sm:%s306]
            %356 = vst [vmem:[%s314 + $0xa0] sm:%s306] %v355
            %v357 = vld [vmem:[%s313 + $0xa8] sm:%s306]
            %358 = vst [vmem:[%s314 + $0xa8] sm:%s306] %v357
            %v359 = vld [vmem:[%s313 + $0xb0] sm:%s306]
            %360 = vst [vmem:[%s314 + $0xb0] sm:%s306] %v359
            %v361 = vld [vmem:[%s313 + $0xb8] sm:%s306]
            %362 = vst [vmem:[%s314 + $0xb8] sm:%s306] %v361
            %v363 = vld [vmem:[%s313 + $0xc0] sm:%s306]
            %364 = vst [vmem:[%s314 + $0xc0] sm:%s306] %v363
          $region34: #{_linear_features_impl.1} parent=28 // loop_footer
            %s312 = sadd.s32 1, %s308
          $region35: #{_linear_features_impl.1} parent=28 // loop_footer_branch
            %307 = sbr.rel target = $region31
          $region36: #{_linear_features_impl.1} parent=28 // loop_exit
            _
        $region29: #{_linear_features_impl.1} parent=20 // pred_fallthru
          _
      $region21: #{_linear_features_impl.1} parent=16 // pred_fallthru
        _
      %427 = vnop
    $region17: #{_linear_features_impl.1} parent=1 // pred_fallthru
      _
    // Predicated region
    $region52: #{_linear_features_impl.1} parent=1 // pred_check
      _
    $region53: #{_linear_features_impl.1} parent=1 // pred_check_branch
      %429 = sbr.rel (0) target = $region55
    $region54: #{_linear_features_impl.1} parent=1 // pred_region
      _
    $region55: #{_linear_features_impl.1} parent=1 // pred_fallthru
      _

</llo_original>
